<compile_context>
chip_gen: v6e
topology: v6e:2x2x1
jax: 0.10.0
libtpu: 0.0.40
codegen_flags: <defaults>
</compile_context>

<pallas_src>
import jax
import jax.numpy as jnp
from jax.experimental import pallas as pl
from jax.experimental.pallas import tpu as pltpu

_BN_EPS = 1e-5
_VMEM_LIMIT = 48 * 1024 * 1024   # works on v5e / v6e / v7x
_TILE_BUDGET = 32 * 1024 * 1024  # double-buffered working-set budget


def _round_up(x, m):
    return (x + m - 1) // m * m


def _pick_t_tile(T, cin_p, cout_p):
    """Largest lane-aligned T tile whose double-buffered footprint fits the budget.

    The tile is picked first; T is then padded up to a multiple of it, so an
    awkward T never forces a tiny (low-roofline) tile.
    """
    t_aligned = _round_up(T, 128)
    for tt in (1024, 512, 256, 128):
        if tt > t_aligned:
            continue
        # 2x-buffered x + out blocks, 2x-buffered resident W, y temp, vectors.
        need = 4 * (2 * (cin_p + cout_p) * tt + cout_p * tt
                    + 2 * cout_p * cin_p + 8 * cout_p)
        if need <= _TILE_BUDGET:
            return tt
    return 128


def _stats_kernel(x_ref, w_ref, ssum_ref, ssq_ref):
    # x_ref: (1, Cin, Tt)   w_ref: (Cout, Cin)
    # ssum_ref / ssq_ref: (1, 1, 1, Cout)  -- channel on the LANE axis.
    y = jnp.dot(w_ref[...], x_ref[0], preferred_element_type=jnp.float32)
    ssum_ref[0, 0] = jnp.sum(y, axis=1)[None, :]
    ssq_ref[0, 0] = jnp.sum(y * y, axis=1)[None, :]


def _bn_relu_kernel(x_ref, w_ref, scale_ref, shift_ref, o_ref):
    # Recompute y = W @ x in-tile (saves the y HBM round trip), then one FMA
    # + max per element for the fused BN-affine + ReLU.
    y = jnp.dot(w_ref[...], x_ref[0], preferred_element_type=jnp.float32)
    o_ref[0] = jnp.maximum(y * scale_ref[...] + shift_ref[...], 0.0)


def linlayer_forward(x, w, b, gamma, beta):
    """x: (B, C_in, T) f32 -> (B, C_out, T) f32.

    `b` (the Linear bias) is accepted for API parity with the PyTorch module
    but intentionally unused: with training-mode batch statistics the BN mean
    subtraction cancels any per-channel constant, so dropping it is exact.
    """
    del b
    B, Cin, T = x.shape
    Cout = w.shape[0]

    cin_p = _round_up(Cin, 8)
    cout_p = _round_up(Cout, 8)
    tt = _pick_t_tile(T, cin_p, cout_p)
    t_pad = _round_up(T, tt)
    n_t = t_pad // tt

    # Zero-pad to aligned shapes (no-ops when already aligned).  With the bias
    # dropped, padded time columns yield y == 0 exactly and contribute nothing
    # to the channel sums / sums of squares.
    x_p = jnp.pad(x, ((0, 0), (0, cin_p - Cin), (0, t_pad - T)))
    w_p = jnp.pad(w, ((0, cout_p - Cout), (0, cin_p - Cin)))
    # Keep gamma/beta pads at 0 -> padded channels get scale=shift=0 (no NaN).
    gamma_p = jnp.pad(gamma, (0, cout_p - Cout))
    beta_p = jnp.pad(beta, (0, cout_p - Cout))

    cparams = pltpu.CompilerParams(
        dimension_semantics=("parallel", "parallel"),  # megacore sharding (v7x)
        vmem_limit_bytes=_VMEM_LIMIT,
    )

    # ---- Pass 1 (stats-only): per-(batch, T-tile) channel sums / sumsq ------
    psum, psq = pl.pallas_call(
        _stats_kernel,
        out_shape=(
            jax.ShapeDtypeStruct((B, n_t, 1, cout_p), jnp.float32),
            jax.ShapeDtypeStruct((B, n_t, 1, cout_p), jnp.float32),
        ),
        grid=(B, n_t),
        in_specs=[
            pl.BlockSpec((1, cin_p, tt), lambda bi, ti: (bi, 0, ti)),
            pl.BlockSpec((cout_p, cin_p), lambda bi, ti: (0, 0)),  # W resident
        ],
        out_specs=(
            pl.BlockSpec((1, 1, 1, cout_p), lambda bi, ti: (bi, ti, 0, 0)),
            pl.BlockSpec((1, 1, 1, cout_p), lambda bi, ti: (bi, ti, 0, 0)),
        ),
        compiler_params=cparams,
    )(x_p, w_p)

    # ---- Tiny glue: fold BN into one scale/shift vector per channel ---------
    # NOTE: var = E[y^2] - mean^2 in f32.  Fine for roughly centered
    # activations (training-mode BN); could cancel badly if |mean| >> std at
    # very large B*T (a shifted/Welford accumulation would be safer then).
    n = jnp.float32(B * T)                       # real sample count (pads are 0)
    s1 = jnp.sum(psum, axis=(0, 1, 2))           # (cout_p,)
    s2 = jnp.sum(psq, axis=(0, 1, 2))            # (cout_p,)
    mean = s1 / n
    var = s2 / n - mean * mean                   # biased variance (training BN)
    scale = gamma_p * jax.lax.rsqrt(var + _BN_EPS)
    shift = beta_p - mean * scale
    scale = scale.reshape(cout_p, 1)
    shift = shift.reshape(cout_p, 1)

    # ---- Pass 2: recompute y = W @ x, fused BN-affine + ReLU ----------------
    out_p = pl.pallas_call(
        _bn_relu_kernel,
        out_shape=jax.ShapeDtypeStruct((B, cout_p, t_pad), jnp.float32),
        grid=(B, n_t),
        in_specs=[
            pl.BlockSpec((1, cin_p, tt), lambda bi, ti: (bi, 0, ti)),
            pl.BlockSpec((cout_p, cin_p), lambda bi, ti: (0, 0)),  # W resident
            pl.BlockSpec((cout_p, 1), lambda bi, ti: (0, 0)),
            pl.BlockSpec((cout_p, 1), lambda bi, ti: (0, 0)),
        ],
        out_specs=pl.BlockSpec((1, cout_p, tt), lambda bi, ti: (bi, 0, ti)),
        compiler_params=cparams,
    )(x_p, w_p, scale, shift)

    return out_p[:, :Cout, :T]


def _reference(x, w, b, gamma, beta):
    y = jnp.einsum("bct,oc->bot", x, w) + b[None, :, None]
    mean = jnp.mean(y, axis=(0, 2), keepdims=True)
    var = jnp.mean((y - mean) ** 2, axis=(0, 2), keepdims=True)
    y_hat = (y - mean) / jnp.sqrt(var + _BN_EPS)
    return jnp.maximum(y_hat * gamma[None, :, None] + beta[None, :, None], 0.0)


if __name__ == "__main__":
    key = jax.random.PRNGKey(0)
    B, Cin, Cout, T = 2, 16, 32, 8

    k_x, k_w, k_b, k_g, k_be = jax.random.split(key, 5)
    x = jax.random.normal(k_x, (B, Cin, T), dtype=jnp.float32)

    # Deterministic parameter init (uniform like nn.Linear's default scale).
    bound = 1.0 / (Cin ** 0.5)
    w = jax.random.uniform(k_w, (Cout, Cin), jnp.float32, -bound, bound)
    b = jax.random.uniform(k_b, (Cout,), jnp.float32, -bound, bound)
    # Non-trivial BN affine parameters to exercise the scale/shift path.
    gamma = jax.random.uniform(k_g, (Cout,), jnp.float32, 0.5, 1.5)
    beta = 0.1 * jax.random.normal(k_be, (Cout,), dtype=jnp.float32)

    out = linlayer_forward(x, w, b, gamma, beta)
    out = jax.block_until_ready(out)

    ref = _reference(x, w, b, gamma, beta)
    assert out.shape == (B, Cout, T)
    assert jnp.allclose(out, ref, atol=1e-4, rtol=1e-4), "mismatch vs reference"

    print("KERNEL_OK")
</pallas_src>

<mosaic_0001>
module attributes {stable_mosaic.version = 11 : i64} {
  func.func @_stats_kernel(%arg0: i32, %arg1: i32, %arg2: memref<1x16x128xf32, #tpu.memory_space<vmem>>, %arg3: memref<32x16xf32, #tpu.memory_space<vmem>>, %arg4: memref<1x1x1x32xf32, #tpu.memory_space<vmem>>, %arg5: memref<1x1x1x32xf32, #tpu.memory_space<vmem>>) attributes {dimension_semantics = [#tpu.dimension_semantics<parallel>, #tpu.dimension_semantics<parallel>], iteration_bounds = array<i64: 2, 1>, scalar_prefetch = 0 : i64, scratch_operands = 0 : i64, tpu.core_type = #tpu.core_type<tc>, window_params = [{transform_indices = @transform_0, window_bounds = array<i64: 1, 16, 128>}, {pipeline_mode = #tpu.pipeline_mode<synchronous>, transform_indices = @transform_1, window_bounds = array<i64: 32, 16>}, {transform_indices = @transform_2, window_bounds = array<i64: 1, 1, 1, 32>}, {transform_indices = @transform_3, window_bounds = array<i64: 1, 1, 1, 32>}]} {
    %c0 = arith.constant 0 : index
    %c0_0 = arith.constant 0 : index
    %0 = vector.load %arg3[%c0, %c0_0] : memref<32x16xf32, #tpu.memory_space<vmem>>, vector<32x16xf32>
    %c0_1 = arith.constant 0 : index
    %c0_2 = arith.constant 0 : index
    %c0_3 = arith.constant 0 : index
    %1 = vector.load %arg2[%c0_1, %c0_2, %c0_3] : memref<1x16x128xf32, #tpu.memory_space<vmem>>, vector<1x16x128xf32>
    %2 = vector.shape_cast %1 : vector<1x16x128xf32> to vector<16x128xf32>
    %cst = arith.constant dense<0.000000e+00> : vector<32x128xf32>
    %3 = tpu.matmul %0, %2, %cst {dimension_numbers = #tpu.dot_dimension_numbers<[1], [0], [0], [1], [0, 0, 1, 1], [], []>} : vector<32x16xf32>, vector<16x128xf32>, vector<32x128xf32> -> vector<32x128xf32>
    %cst_4 = arith.constant dense<0.000000e+00> : vector<32xf32>
    %4 = vector.multi_reduction <add>, %3, %cst_4 [1] : vector<32x128xf32> to vector<32xf32>
    %5 = vector.shape_cast %4 : vector<32xf32> to vector<1x32xf32>
    %c0_5 = arith.constant 0 : index
    %c0_6 = arith.constant 0 : index
    %c0_7 = arith.constant 0 : index
    %c0_8 = arith.constant 0 : index
    %6 = vector.load %arg4[%c0_5, %c0_6, %c0_7, %c0_8] : memref<1x1x1x32xf32, #tpu.memory_space<vmem>>, vector<1x1x1x32xf32>
    %7 = vector.shape_cast %6 : vector<1x1x1x32xf32> to vector<1x32xf32>
    %8 = vector.shape_cast %5 : vector<1x32xf32> to vector<1x1x1x32xf32>
    tpu.vector_store %arg4[%c0_5, %c0_6, %c0_7, %c0_8], %8 {strides = array<i32>} : memref<1x1x1x32xf32, #tpu.memory_space<vmem>>, vector<1x1x1x32xf32>,
    %9 = arith.mulf %3, %3 : vector<32x128xf32>
    %cst_9 = arith.constant dense<0.000000e+00> : vector<32xf32>
    %10 = vector.multi_reduction <add>, %9, %cst_9 [1] : vector<32x128xf32> to vector<32xf32>
    %11 = vector.shape_cast %10 : vector<32xf32> to vector<1x32xf32>
    %c0_10 = arith.constant 0 : index
    %c0_11 = arith.constant 0 : index
    %c0_12 = arith.constant 0 : index
    %c0_13 = arith.constant 0 : index
    %12 = vector.load %arg5[%c0_10, %c0_11, %c0_12, %c0_13] : memref<1x1x1x32xf32, #tpu.memory_space<vmem>>, vector<1x1x1x32xf32>
    %13 = vector.shape_cast %12 : vector<1x1x1x32xf32> to vector<1x32xf32>
    %14 = vector.shape_cast %11 : vector<1x32xf32> to vector<1x1x1x32xf32>
    tpu.vector_store %arg5[%c0_10, %c0_11, %c0_12, %c0_13], %14 {strides = array<i32>} : memref<1x1x1x32xf32, #tpu.memory_space<vmem>>, vector<1x1x1x32xf32>,
    return
  }
  func.func @transform_0(%arg0: i32, %arg1: i32) -> (i32, i32, i32) {
    %c0_i32 = arith.constant 0 : i32
    %c0_i32_0 = arith.constant 0 : i32
    return %arg0, %c0_i32, %arg1 : i32, i32, i32
  }
  func.func @transform_1(%arg0: i32, %arg1: i32) -> (i32, i32) {
    %c0_i32 = arith.constant 0 : i32
    %c0_i32_0 = arith.constant 0 : i32
    %c0_i32_1 = arith.constant 0 : i32
    return %c0_i32, %c0_i32_0 : i32, i32
  }
  func.func @transform_2(%arg0: i32, %arg1: i32) -> (i32, i32, i32, i32) {
    %c0_i32 = arith.constant 0 : i32
    %c0_i32_0 = arith.constant 0 : i32
    %c0_i32_1 = arith.constant 0 : i32
    return %arg0, %arg1, %c0_i32, %c0_i32_0 : i32, i32, i32, i32
  }
  func.func @transform_3(%arg0: i32, %arg1: i32) -> (i32, i32, i32, i32) {
    %c0_i32 = arith.constant 0 : i32
    %c0_i32_0 = arith.constant 0 : i32
    %c0_i32_1 = arith.constant 0 : i32
    return %arg0, %arg1, %c0_i32, %c0_i32_0 : i32, i32, i32, i32
  }
}

</mosaic_0001>

<llo_original>
// kernel: tpu_custom_call.1
$region0: #{tpu_custom_call.1}
  #allocation0 [shape = 'u32[]', space=smem, size = 0x4, offset = 0x4, fixed_abs, tag = 'smem constant byte address 0x4 - core index']
  #allocation1 [shape = 'u32[144,128]{1,0:T(1,128)}', space=vmem, size = 0x12000, scoped, tag = 'internal scratch']
  %s0 = inlined_call_operand.vmem [shape: f32[2,16,128], index: 0, kind: input, shape index: {}]
  %s1 = inlined_call_operand.vmem [shape: f32[32,16], index: 1, kind: input, shape index: {}]
  %s2 = inlined_call_operand.hbm [shape: f32[2,1,1,32], index: 2, kind: output, shape index: {0}]
  %s3 = inlined_call_operand.hbm [shape: f32[2,1,1,32], index: 3, kind: output, shape index: {1}]
  %4 = xla_tuple %s2, %s3
  %s5 = sld [smem:[#allocation0]]
  $region49: #{tpu_custom_call.1} parent=0
    _
  %s7 = ssub.s32 1, %s5
  %s8 = scalar_select 0, %s7, %s5
  $region1: #{tpu_custom_call.1} parent=0
    #allocation2 [shape = 'u8[1024]{0}', space=vmem, size = 0x400, scoped, tag = 'output window, operand 0']
    #allocation3 [shape = 's32[2]{0}', space=sflag, size = 0x8, scoped, tag = 'scoped memory for tpu_custom_call.1']
    #allocation4 [shape = 'u8[1024]{0}', space=vmem, size = 0x400, scoped, tag = 'output window, operand 1']
    #allocation5 [shape = 's32[2]{0}', space=sflag, size = 0x8, scoped, tag = 'scoped memory for tpu_custom_call.1']
    %9 = vsyncpa [#allocation3], 0
    %s10 = scalar_lea.sflag [#allocation3], 1
    %11 = vsyncpa %s10, 0
    %12 = vsyncpa [#allocation5], 0
    %s13 = scalar_lea.sflag [#allocation5], 1
    %14 = vsyncpa %s13, 0
    loop: start=0, step=1, limit=4
    $region2: #{tpu_custom_call.1} parent=1 // loop_pre_header
      _
    $region3: #{tpu_custom_call.1} parent=1 // loop_header
      %s16 = sphi 0, %s20
      %p17 = scmp.ge.s32.totalorder %s16, 4
      %s23 = sphi 0, %s35
      %s24 = sphi 0, %s31
      %s25 = sphi 0, %s23
      %s26 = sphi 0, %s24
      %s27 = sphi 0, %s25
      %s28 = sphi 0, %s26
      %s40 = sphi 0, %s42
      %s43 = sphi 0, %s40
      %s44 = sphi 0, %s43
      %s60 = sphi 0, %s44
      %s64 = sphi 0, %s64
      %s66 = sphi 0, %s64
      %s67 = sphi 0, %s66
      %s81 = sphi 0, %s67
      %s89 = sphi 0, %s91
      %s92 = sphi 0, %s89
      %s93 = sphi 0, %s92
      %s109 = sphi 0, %s93
      %s117 = sphi 0, %s119
      %s120 = sphi 0, %s117
      %s121 = sphi 0, %s120
      %s137 = sphi 0, %s121
    $region4: #{tpu_custom_call.1} parent=1 // loop_header_branch
      %19 = sbr.rel (%p17) target = $region8
    $region5: #{tpu_custom_call.1} parent=1 // loop_body
      %s21 = ssub.s32 %s16, 1
      %s22 = ssub.s32 %s16, 2
      %s29 = sadd.s32 1, %s24
      %p30 = scmp.ge.s32.totalorder %s29, 1
      %s31 = scalar_select %p30, 0, %s29
      %s32 = sadd.s32 1, %s23
      %s33 = scalar_select %p30, %s32, %s23
      %p34 = scmp.ge.s32.totalorder %s33, 2
      %s35 = scalar_select %p34, 0, %s33
      %s36 = ssub.s32 %s23, %s35
      %s37 = ssub.s32 %s24, %s31
      %s38 = sor.u32 %s36, %s37
      %p39 = scmp.eq.s32.totalorder %s38, 0
      %s41 = sadd.s32 %s40, 1
      %s42 = scalar_select %p39, %s40, %s41
      %p45 = pneg %p39
      %p46 = scmp.eq.s32.totalorder %s16, 1
      %p47 = por %p45, %p46
      %p48 = scmp.ne.s32.totalorder %s40, %s43
      %p49 = scmp.eq.s32.totalorder %s16, 0
      %p50 = por %p48, %p49
      %p51 = scmp.ne.s32.totalorder %s40, %s43
      %p52 = scmp.eq.s32.totalorder %s21, 1
      %p53 = por %p51, %p52
      %p54 = scmp.ne.s32.totalorder %s43, %s44
      %p55 = scmp.eq.s32.totalorder %s21, 0
      %p56 = por %p54, %p55
      %p57 = scmp.ne.s32.totalorder %s43, %s44
      %p58 = scmp.eq.s32.totalorder %s22, 1
      %p59 = por %p57, %p58
      %p61 = scmp.ne.s32.totalorder %s44, %s60
      %p62 = scmp.eq.s32.totalorder %s22, 0
      %p63 = por %p61, %p62
      %s65 = sadd.s32 %s64, 1
      %p68 = scmp.eq.s32.totalorder %s16, 1
      %p69 = scmp.ne.s32.totalorder %s64, %s66
      %p70 = scmp.eq.s32.totalorder %s16, 0
      %p71 = por %p69, %p70
      %p72 = scmp.ne.s32.totalorder %s64, %s66
      %p73 = scmp.eq.s32.totalorder %s21, 1
      %p74 = por %p72, %p73
      %p75 = scmp.ne.s32.totalorder %s66, %s67
      %p76 = scmp.eq.s32.totalorder %s21, 0
      %p77 = por %p75, %p76
      %p78 = scmp.ne.s32.totalorder %s66, %s67
      %p79 = scmp.eq.s32.totalorder %s22, 1
      %p80 = por %p78, %p79
      %p82 = scmp.ne.s32.totalorder %s67, %s81
      %p83 = scmp.eq.s32.totalorder %s22, 0
      %p84 = por %p82, %p83
      %s85 = ssub.s32 %s23, %s35
      %s86 = ssub.s32 %s24, %s31
      %s87 = sor.u32 %s85, %s86
      %p88 = scmp.eq.s32.totalorder %s87, 0
      %s90 = sadd.s32 %s89, 1
      %s91 = scalar_select %p88, %s89, %s90
      %p94 = pneg %p88
      %p95 = scmp.eq.s32.totalorder %s16, 1
      %p96 = por %p94, %p95
      %p97 = scmp.ne.s32.totalorder %s89, %s92
      %p98 = scmp.eq.s32.totalorder %s16, 0
      %p99 = por %p97, %p98
      %p100 = scmp.ne.s32.totalorder %s89, %s92
      %p101 = scmp.eq.s32.totalorder %s21, 1
      %p102 = por %p100, %p101
      %p103 = scmp.ne.s32.totalorder %s92, %s93
      %p104 = scmp.eq.s32.totalorder %s21, 0
      %p105 = por %p103, %p104
      %p106 = scmp.ne.s32.totalorder %s92, %s93
      %p107 = scmp.eq.s32.totalorder %s22, 1
      %p108 = por %p106, %p107
      %p110 = scmp.ne.s32.totalorder %s93, %s109
      %p111 = scmp.eq.s32.totalorder %s22, 0
      %p112 = por %p110, %p111
      %s113 = ssub.s32 %s23, %s35
      %s114 = ssub.s32 %s24, %s31
      %s115 = sor.u32 %s113, %s114
      %p116 = scmp.eq.s32.totalorder %s115, 0
      %s118 = sadd.s32 %s117, 1
      %s119 = scalar_select %p116, %s117, %s118
      %p122 = pneg %p116
      %p123 = scmp.eq.s32.totalorder %s16, 1
      %p124 = por %p122, %p123
      %p125 = scmp.ne.s32.totalorder %s117, %s120
      %p126 = scmp.eq.s32.totalorder %s16, 0
      %p127 = por %p125, %p126
      %p128 = scmp.ne.s32.totalorder %s117, %s120
      %p129 = scmp.eq.s32.totalorder %s21, 1
      %p130 = por %p128, %p129
      %p131 = scmp.ne.s32.totalorder %s120, %s121
      %p132 = scmp.eq.s32.totalorder %s21, 0
      %p133 = por %p131, %p132
      %p134 = scmp.ne.s32.totalorder %s120, %s121
      %p135 = scmp.eq.s32.totalorder %s22, 1
      %p136 = por %p134, %p135
      %p138 = scmp.ne.s32.totalorder %s121, %s137
      %p139 = scmp.eq.s32.totalorder %s22, 0
      %p140 = por %p138, %p139
      %p141 = scmp.le.s32.totalorder 1, %s16
      %p142 = scmp.lt.s32.totalorder %s16, 3
      %p143 = pnand %p141, %p142
      %p144 = pneg %p143
      // Predicated region
      $region9: #{tpu_custom_call.1} parent=5 // pred_check
        _
      $region10: #{tpu_custom_call.1} parent=5 // pred_check_branch
        %146 = sbr.rel (%p143) target = $region12
      $region11: #{tpu_custom_call.1} parent=5 // pred_region
        %s147 = ssub.s32 %s16, 1
        // Predicated region
        $region13: #{tpu_custom_call.1} parent=11 // pred_check
          %p148 = pneg %p77
        $region14: #{tpu_custom_call.1} parent=11 // pred_check_branch
          %150 = sbr.rel (%p148) target = $region16
        $region15: #{tpu_custom_call.1} parent=11 // pred_region
          _
        $region16: #{tpu_custom_call.1} parent=11 // pred_fallthru
          _
      $region12: #{tpu_custom_call.1} parent=5 // pred_fallthru
        _
      %p151 = scmp.lt.s32.totalorder %s16, 2
      // Predicated region
      $region17: #{tpu_custom_call.1} parent=5 // pred_check
        %p152 = pneg %p151
      $region18: #{tpu_custom_call.1} parent=5 // pred_check_branch
        %154 = sbr.rel (%p152) target = $region20
      $region19: #{tpu_custom_call.1} parent=5 // pred_region
        // Predicated region
        $region21: #{tpu_custom_call.1} parent=19 // pred_check
          %p155 = pneg %p50
        $region22: #{tpu_custom_call.1} parent=19 // pred_check_branch
          %157 = sbr.rel (%p155) target = $region24
        $region23: #{tpu_custom_call.1} parent=19 // pred_region
          %p158 = scmp.lt.s32.totalorder %s23, 1
          %s159 = scalar_select %p158, %s23, 1
          %p160 = scmp.lt.s32.totalorder %s24, 0
          %s161 = scalar_select %p160, %s24, 0
          %s162 = smul.addr %s159, 2
          %s163 = sadd.s32 %s161, %s162
          %s164 = smul.addr %s163, 8
          %s165 = scalar_lea.vmem %s0, %s164
        $region24: #{tpu_custom_call.1} parent=19 // pred_fallthru
          _
      $region20: #{tpu_custom_call.1} parent=5 // pred_fallthru
        _
      %p166 = scmp.le.s32.totalorder 1, %s16
      %p167 = scmp.lt.s32.totalorder %s16, 3
      %p168 = pnand %p166, %p167
      %p169 = pneg %p168
      // Predicated region
      $region25: #{tpu_custom_call.1} parent=5 // pred_check
        _
      $region26: #{tpu_custom_call.1} parent=5 // pred_check_branch
        %171 = sbr.rel (%p168) target = $region28
      $region27: #{tpu_custom_call.1} parent=5 // pred_region
        %s172 = ssub.s32 %s16, 1
        %p173 = scmp.lt.s32.totalorder %s25, 1
        %s174 = scalar_select %p173, %s25, 1
        %p175 = scmp.lt.s32.totalorder %s26, 0
        %s176 = scalar_select %p175, %s26, 0
        %s177 = smul.addr %s174, 2
        %s178 = sadd.s32 %s176, %s177
        %s179 = smul.addr %s178, 8
        %s180 = scalar_lea.vmem %s0, %s179
        %p181 = pneg %p56
        %p182 = pneg %p53
        %p183 = pneg %p77
        %p184 = pneg %p74
        %p185 = pneg %p105
        %p186 = pneg %p102
        %s187 = sand.u32 %s92, 1
        %s188 = scalar_lea.sflag [#allocation3], %s187
        %s189 = sand.u32 %s92, 1
        %s190 = scalar_lea.vmem [#allocation2], %s189
        %p191 = pneg %p133
        %p192 = pneg %p130
        %s193 = sand.u32 %s120, 1
        %s194 = scalar_lea.sflag [#allocation5], %s193
        %s195 = sand.u32 %s120, 1
        %s196 = scalar_lea.vmem [#allocation4], %s195
        %p197 = scmp.lt.s32.totalorder %s25, 1
        %s198 = scalar_select %p197, %s25, 1
        %p199 = scmp.lt.s32.totalorder %s26, 0
        %s200 = scalar_select %p199, %s26, 0
        %s201 = smul.addr %s198, 2
        %s202 = sadd.s32 %s200, %s201
        %s203 = smul.addr %s202, 8
        %s204 = scalar_lea.vmem %s0, %s203
        %v205 = vld [vmem:[%s1] sm:$0xff]
        %v206 = vld [vmem:[%s1 + $0x8] sm:$0xff]
        %v207 = vld [vmem:[%s1 + $0x10] sm:$0xff]
        %v208 = vld [vmem:[%s1 + $0x18] sm:$0xff]
        %v209 = vld [vmem:[%s204] sm:$0xff]
        %v210 = vld [vmem:[%s204 + $0x8] sm:$0xff]
        %vm211 = vcmask 130048
        %v213 = vsel %vm211, %v205, 0
        %v216 = vsel %vm211, %v206, 0
        %v219 = vsel %vm211, %v207, 0
        %v222 = vsel %vm211, %v208, 0
        %224 = vmatprep.subr.mxu0 0.0
        %225 = vmatpush1.msra.mxu0 0.0
        %226 = vmatprep.subr.mxu0 0.0
        %227 = vmatpush1.msra.mxu0 0.0
        %228 = vmatprep.subr.mxu0 0.0
        %229 = vmatpush1.msra.mxu0 0.0
        %230 = vmatprep.subr.mxu0 0.0
        %231 = vmatpush1.msra.mxu0 0.0
        %232 = vmatprep.subr.mxu0 0.0
        %233 = vmatpush1.msra.mxu0 0.0
        %234 = vmatprep.subr.mxu0 0.0
        %235 = vmatpush1.msra.mxu0 0.0
        %236 = vmatprep.subr.mxu0 0.0
        %237 = vmatpush1.msra.mxu0 0.0
        %238 = vmatprep.subr.mxu0 0.0
        %239 = vmatpush1.msra.mxu0 0.0
        %240 = vmatprep.subr.mxu0 0.0
        %241 = vmatpush1.msra.mxu0 0.0
        %242 = vmatprep.subr.mxu0 0.0
        %243 = vmatpush1.msra.mxu0 0.0
        %244 = vmatprep.subr.mxu0 0.0
        %245 = vmatpush1.msra.mxu0 0.0
        %246 = vmatprep.subr.mxu0 0.0
        %247 = vmatpush1.msra.mxu0 0.0
        %248 = vmatprep.subr.mxu0 0.0
        %249 = vmatpush1.msra.mxu0 0.0
        %250 = vmatprep.subr.mxu0 0.0
        %251 = vmatpush1.msra.mxu0 0.0
        %252 = vmatprep.subr.mxu0 0.0
        %253 = vmatpush1.msra.mxu0 %v210
        %254 = vmatprep.subr.mxu0 0.0
        %255 = vmatpush1.msra.mxu0 %v209
        %256 = vmatprep.subr.mxu0 0.0
        %257 = vmatpush2.msra.mxu0 0.0
        %258 = vmatprep.subr.mxu0 0.0
        %259 = vmatpush2.msra.mxu0 0.0
        %260 = vmatprep.subr.mxu0 0.0
        %261 = vmatpush2.msra.mxu0 0.0
        %262 = vmatprep.subr.mxu0 0.0
        %263 = vmatpush2.msra.mxu0 0.0
        %264 = vmatprep.subr.mxu0 0.0
        %265 = vmatpush2.msra.mxu0 0.0
        %266 = vmatprep.subr.mxu0 0.0
        %267 = vmatpush2.msra.mxu0 0.0
        %268 = vmatprep.subr.mxu0 0.0
        %269 = vmatpush2.msra.mxu0 0.0
        %270 = vmatprep.subr.mxu0 0.0
        %271 = vmatpush2.msra.mxu0 0.0
        %272 = vmatprep.subr.mxu0 0.0
        %273 = vmatpush2.msra.mxu0 0.0
        %274 = vmatprep.subr.mxu0 0.0
        %275 = vmatpush2.msra.mxu0 0.0
        %276 = vmatprep.subr.mxu0 0.0
        %277 = vmatpush2.msra.mxu0 0.0
        %278 = vmatprep.subr.mxu0 0.0
        %279 = vmatpush2.msra.mxu0 0.0
        %280 = vmatprep.subr.mxu0 0.0
        %281 = vmatpush2.msra.mxu0 0.0
        %282 = vmatprep.subr.mxu0 0.0
        %283 = vmatpush2.msra.mxu0 0.0
        %284 = vmatprep.subr.mxu0 0.0
        %285 = vmatpush2.msra.mxu0 0.0
        %286 = vmatprep.subr.mxu0 0.0
        %287 = vmatpush2.msra.mxu0 0.0
        %288 = vmatprep.mubr.f32.mxu0 0.0
        %289 = vmatmul.mubr.f32.gmra.mxu0 %v213
        %v290 = vpop.f32.mrf.mxu0
        %v291 = vadd.f32 0.0, %v290
        %v292 = vpop.f32.mrf.mxu0
        %293 = vmatprep.mubr.f32.mxu0 0.0
        %294 = vmatmul.mubr.f32.gmra.mxu0 %v216
        %v295 = vpop.f32.mrf.mxu0
        %v296 = vadd.f32 0.0, %v295
        %v297 = vpop.f32.mrf.mxu0
        %298 = vmatprep.mubr.f32.mxu0 0.0
        %299 = vmatmul.mubr.f32.gmra.mxu0 %v219
        %v300 = vpop.f32.mrf.mxu0
        %v301 = vadd.f32 0.0, %v300
        %v302 = vpop.f32.mrf.mxu0
        %303 = vmatprep.mubr.f32.mxu0 0.0
        %304 = vmatmul.mubr.f32.gmra.mxu0 %v222
        %v305 = vpop.f32.mrf.mxu0
        %v306 = vadd.f32 0.0, %v305
        %v307 = vpop.f32.mrf.mxu0
        %308 = vdwg.mxu0
        %309 = vadd.xlane.f32.xlu0 %v291
        %v310 = vpop.xlane.xlu0 %309
        %311 = vadd.xlane.f32.xlu0 %v296
        %v312 = vpop.xlane.xlu0 %311
        %313 = vadd.xlane.f32.xlu0 %v301
        %v314 = vpop.xlane.xlu0 %313
        %315 = vadd.xlane.f32.xlu0 %v306
        %v316 = vpop.xlane.xlu0 %315
        %v321 = vlaneseq
        %v322 = vand.u32 %v321, 127
        %v323 = vlaneseq
        %v324 = vshrl.u32 %v323, 7
        %v325 = vsub.s32 %v322, %v324
        %v326 = vrot.slane %v310, %v325
        %v327 = vadd.s32 %v322, 4294967288
        %v328 = vlaneseq
        %v329 = vshrl.u32 %v328, 7
        %v330 = vsub.s32 %v327, %v329
        %v331 = vrot.slane %v312, %v330
        %vm332 = vcmask 130112
        %v333 = vsel %vm332, %v331, %v326
        %v334 = vadd.s32 %v322, 4294967280
        %v335 = vlaneseq
        %v336 = vshrl.u32 %v335, 7
        %v337 = vsub.s32 %v334, %v336
        %v338 = vrot.slane %v314, %v337
        %vm339 = vcmask 195712
        %v340 = vsel %vm339, %v338, %v333
        %v341 = vadd.s32 %v322, 4294967272
        %v342 = vlaneseq
        %v343 = vshrl.u32 %v342, 7
        %v344 = vsub.s32 %v341, %v343
        %v345 = vrot.slane %v316, %v344
        %vm346 = vcmask 261312
        %v347 = vsel %vm346, %v345, %v340
        %vm349 = vcmask 253952
        %350 = vst.msk [vmem:[%s190] sm:$0x1] %vm349, %v347
        %v351 = vmul.f32 %v291, %v291
        %v352 = vmul.f32 %v296, %v296
        %v353 = vmul.f32 %v301, %v301
        %v354 = vmul.f32 %v306, %v306
        %355 = vadd.xlane.f32.xlu0 %v351
        %v356 = vpop.xlane.xlu0 %355
        %357 = vadd.xlane.f32.xlu0 %v352
        %v358 = vpop.xlane.xlu0 %357
        %359 = vadd.xlane.f32.xlu0 %v353
        %v360 = vpop.xlane.xlu0 %359
        %361 = vadd.xlane.f32.xlu0 %v354
        %v362 = vpop.xlane.xlu0 %361
        %v367 = vlaneseq
        %v368 = vshrl.u32 %v367, 7
        %v369 = vsub.s32 %v322, %v368
        %v370 = vrot.slane %v356, %v369
        %v371 = vlaneseq
        %v372 = vshrl.u32 %v371, 7
        %v373 = vsub.s32 %v327, %v372
        %v374 = vrot.slane %v358, %v373
        %v375 = vsel %vm332, %v374, %v370
        %v376 = vlaneseq
        %v377 = vshrl.u32 %v376, 7
        %v378 = vsub.s32 %v334, %v377
        %v379 = vrot.slane %v360, %v378
        %v380 = vsel %vm339, %v379, %v375
        %v381 = vlaneseq
        %v382 = vshrl.u32 %v381, 7
        %v383 = vsub.s32 %v341, %v382
        %v384 = vrot.slane %v362, %v383
        %v385 = vsel %vm346, %v384, %v380
        %387 = vst.msk [vmem:[%s196] sm:$0x1] %vm349, %v385
        %s388 = sand.u32 %s92, 1
        %s389 = scalar_lea.sflag [#allocation3], %s388
        %s390 = sand.u32 %s92, 1
        %s391 = scalar_lea.vmem [#allocation2], %s390
        %s392 = sand.u32 %s120, 1
        %s393 = scalar_lea.sflag [#allocation5], %s392
        %s394 = sand.u32 %s120, 1
        %s395 = scalar_lea.vmem [#allocation4], %s394
        // Predicated region
        $region29: #{tpu_custom_call.1} parent=27 // pred_check
          %p396 = pneg %p102
        $region30: #{tpu_custom_call.1} parent=27 // pred_check_branch
          %398 = sbr.rel (%p396) target = $region32
        $region31: #{tpu_custom_call.1} parent=27 // pred_region
          %s400 = ssub.s32 16, 16
          %401 = vsyncadd %s389, %s400
          %s402 = sadd.s32 %s26, %s25
          %s403 = smul.addr %s402, 16
          %s404 = scalar_lea.hbm %s2, %s403
          %s406 = sshll.u32 %s391, 4
          %s407 = int_to_ptr.vmem [resolvable:$true] %s406
          %409 = dma.vmem_to_hbm [thread:$0]  %s407, 16, %s404, %s389
        $region32: #{tpu_custom_call.1} parent=27 // pred_fallthru
          _
        // Predicated region
        $region33: #{tpu_custom_call.1} parent=27 // pred_check
          %p410 = pneg %p130
        $region34: #{tpu_custom_call.1} parent=27 // pred_check_branch
          %412 = sbr.rel (%p410) target = $region36
        $region35: #{tpu_custom_call.1} parent=27 // pred_region
          %s414 = ssub.s32 16, 16
          %415 = vsyncadd %s393, %s414
          %s416 = sadd.s32 %s26, %s25
          %s417 = smul.addr %s416, 16
          %s418 = scalar_lea.hbm %s3, %s417
          %s420 = sshll.u32 %s395, 4
          %s421 = int_to_ptr.vmem [resolvable:$true] %s420
          %423 = dma.vmem_to_hbm [thread:$0]  %s421, 16, %s418, %s393
        $region36: #{tpu_custom_call.1} parent=27 // pred_fallthru
          _
      $region28: #{tpu_custom_call.1} parent=5 // pred_fallthru
        _
      %p424 = scmp.le.s32.totalorder 2, %s16
      // Predicated region
      $region37: #{tpu_custom_call.1} parent=5 // pred_check
        %p425 = pneg %p424
      $region38: #{tpu_custom_call.1} parent=5 // pred_check_branch
        %427 = sbr.rel (%p425) target = $region40
      $region39: #{tpu_custom_call.1} parent=5 // pred_region
        %s428 = ssub.s32 %s16, 2
        // Predicated region
        $region41: #{tpu_custom_call.1} parent=39 // pred_check
          %p429 = pneg %p108
        $region42: #{tpu_custom_call.1} parent=39 // pred_check_branch
          %431 = sbr.rel (%p429) target = $region44
        $region43: #{tpu_custom_call.1} parent=39 // pred_region
          %s432 = sand.u32 %s93, 1
          %s433 = scalar_lea.sflag [#allocation3], %s432
          %s434 = sand.u32 %s93, 1
          %s435 = scalar_lea.vmem [#allocation2], %s434
          %436 = dma.done %s433, 16
        $region44: #{tpu_custom_call.1} parent=39 // pred_fallthru
          _
        // Predicated region
        $region45: #{tpu_custom_call.1} parent=39 // pred_check
          %p437 = pneg %p136
        $region46: #{tpu_custom_call.1} parent=39 // pred_check_branch
          %439 = sbr.rel (%p437) target = $region48
        $region47: #{tpu_custom_call.1} parent=39 // pred_region
          %s440 = sand.u32 %s121, 1
          %s441 = scalar_lea.sflag [#allocation5], %s440
          %s442 = sand.u32 %s121, 1
          %s443 = scalar_lea.vmem [#allocation4], %s442
          %444 = dma.done %s441, 16
        $region48: #{tpu_custom_call.1} parent=39 // pred_fallthru
          _
      $region40: #{tpu_custom_call.1} parent=5 // pred_fallthru
        _
    $region6: #{tpu_custom_call.1} parent=1 // loop_footer
      %s20 = sadd.s32 1, %s16
    $region7: #{tpu_custom_call.1} parent=1 // loop_footer_branch
      %15 = sbr.rel target = $region3
    $region8: #{tpu_custom_call.1} parent=1 // loop_exit
      _
    %445 = vsyncpa [#allocation3], 1
    %s446 = scalar_lea.sflag [#allocation3], 1
    %447 = vsyncpa %s446, 1
    %448 = vsyncpa [#allocation5], 1
    %s449 = scalar_lea.sflag [#allocation5], 1
    %450 = vsyncpa %s449, 1

</llo_original>
